<compile_context>
chip_gen: v6e
topology: v6e:2x2x1
jax: 0.10.0
libtpu: 0.0.40
codegen_flags: <defaults>
</compile_context>

<pallas_src>
import jax
import jax.numpy as jnp
from jax import lax
from jax.experimental import pallas as pl
from jax.experimental.pallas import tpu as pltpu

# ---- config (mirrors cfg.n_orientations in the original code) ----
N_ORIENTATIONS = 6

_LANE = 128


def _round_up(x, m):
    return ((x + m - 1) // m) * m


def _grasp_head_kernel(x_ref, w_ref, b_ref, o_ref):
    """x_ref: (C, T) spatial tile (channels on sublanes, pixels on lanes).
    w_ref: (OUT_C, C) fused 1x1-conv weight.  b_ref: (OUT_C, 1) fused f32 bias.
    o_ref: (OUT_C, T) output tile -- already NCHW channel order (lane-dense store)."""
    y = jnp.dot(w_ref[...], x_ref[...], preferred_element_type=jnp.float32)
    y = y + b_ref[...]                       # broadcast (OUT_C, 1) over lanes

    row = lax.broadcasted_iota(jnp.int32, y.shape, 0)   # output-channel index
    is_conf = row < 1                        # channel 0          -> identity
    is_wh = (row >= 3) & (row < 5)           # channels 3..4      -> exp
    # channels 1..2 (xy) and 5.. (angle)     -> sigmoid

    # One full-width exp: exp(y) for the wh rows, exp(-y) for the sigmoid rows
    # (sigmoid(y) = 1 / (1 + exp(-y))).  Conf rows get exp(0), so no inf even in
    # discarded / padded lanes.
    exp_arg = jnp.where(is_conf, 0.0, jnp.where(is_wh, y, -y))
    e = jnp.exp(exp_arg)
    # Exact reciprocal: EUP/VPU work is pure filler under the HBM roofline here,
    # so the exact form costs nothing and removes the approx-recip error on xy/angle.
    sig = pl.reciprocal(1.0 + e, approx=False)
    out = jnp.where(is_conf, y, jnp.where(is_wh, e, sig))
    o_ref[...] = out.astype(o_ref.dtype)


def grasp_model_forward(x_nchw, w_cat, b_cat, *, tile_hw=8192):
    """x_nchw: (B, C, H, W) feature map (backbone/feature_forward output).
               Feed bf16 for the bandwidth-bound fast path; f32 also works.
    w_cat:  (OUT_C, C) fused 1x1-conv weights, rows ordered conf|xy|wh|angle.
    b_cat:  (OUT_C,)   fused biases.
    Returns (B, OUT_C, H, W) == torch.cat((conf, sigmoid(xy), exp(wh), sigmoid(tha)), 1),
    in x_nchw.dtype.
    """
    B, C, H, W = x_nchw.shape
    out_c = w_cat.shape[0]
    HW = H * W

    # NCHW flattened to (B, C, H*W) is already the layout we want: no transposes.
    x3 = x_nchw.reshape(B, C, HW)
    # Stream weights in the input dtype (bf16 inputs -> native bf16 MXU path);
    # bias stays f32 and is added after the f32-accumulated matmul.
    w_kernel = w_cat.astype(x3.dtype)
    b_col = b_cat.reshape(out_c, 1).astype(jnp.float32)

    # ---- spatial tiling -------------------------------------------------------
    if HW <= _LANE:
        # Tiny feature map: single full-extent tile; masked store is microseconds,
        # cheaper than any pad/transpose fix.
        tile = HW
    else:
        tile_cap = max(_LANE, (tile_hw // _LANE) * _LANE)
        n_steps = pl.cdiv(HW, tile_cap)
        if B == 1 and n_steps == 1:
            # v7x has 2 TensorCores; with B==1 a single full-extent tile would
            # leave one idle.  Costs one extra (~0.35us) step on v5e/v6e only.
            n_steps = 2
        # Balance ragged tails: roughly equal lanes per step, multiple of 128.
        tile = min(HW, _round_up(pl.cdiv(HW, n_steps), _LANE))
    grid = (B, pl.cdiv(HW, tile))

    out_dtype = x_nchw.dtype
    in_itemsize = jnp.dtype(x3.dtype).itemsize
    out_itemsize = jnp.dtype(out_dtype).itemsize
    w_itemsize = jnp.dtype(w_kernel.dtype).itemsize

    # Advisory cost: exp + reciprocal = 2 transcendentals per output element;
    # read/write bytes use their own itemsizes (they may differ, e.g. bf16 I/O).
    cost = pl.CostEstimate(
        flops=2 * B * HW * C * out_c,
        transcendentals=2 * B * HW * out_c,
        bytes_accessed=(B * C * HW) * in_itemsize
        + (B * out_c * HW) * out_itemsize
        + out_c * C * w_itemsize
        + out_c * 4,
    )

    # Explicit scoped-VMEM limit so large tiles don't hit the v5e 16 MiB default:
    # double-buffered input + output tiles, ~6 f32 activation temporaries, weights.
    vmem_est = (
        2 * C * tile * in_itemsize
        + 2 * out_c * tile * out_itemsize
        + 6 * out_c * tile * 4
        + out_c * C * w_itemsize
        + out_c * 4
    )
    vmem_limit = min(max(32 << 20, int(1.5 * vmem_est)), 100 << 20)

    out3 = pl.pallas_call(
        _grasp_head_kernel,
        out_shape=jax.ShapeDtypeStruct((B, out_c, HW), out_dtype),
        grid=grid,
        in_specs=[
            pl.BlockSpec((None, C, tile), lambda b, j: (b, 0, j)),  # x tile (batch squeezed)
            pl.BlockSpec((out_c, C), lambda b, j: (0, 0)),          # fused weight (VMEM-resident)
            pl.BlockSpec((out_c, 1), lambda b, j: (0, 0)),          # fused bias (VMEM-resident)
        ],
        out_specs=pl.BlockSpec((None, out_c, tile), lambda b, j: (b, 0, j)),
        compiler_params=pltpu.CompilerParams(
            dimension_semantics=("parallel", "parallel"),
            vmem_limit_bytes=vmem_limit,
        ),
        cost_estimate=cost,
    )(x3, w_kernel, b_col)

    # (B, OUT_C, H*W) is already NCHW order -- just restore H, W.
    return out3.reshape(B, out_c, H, W)


def _reference_forward(x_nchw, w_cat, b_cat):
    """Pure-JAX reference of the PyTorch forward (heads only), in f32."""
    x32 = x_nchw.astype(jnp.float32)
    y = jnp.einsum("oc,bchw->bohw", w_cat.astype(jnp.float32), x32,
                   precision=lax.Precision.HIGHEST) + b_cat[None, :, None, None]
    conf = y[:, 0:1]
    xy = jax.nn.sigmoid(y[:, 1:3])
    wh = jnp.exp(y[:, 3:5])
    tha = jax.nn.sigmoid(y[:, 5:])
    return jnp.concatenate([conf, xy, wh, tha], axis=1)


if __name__ == "__main__":
    key = jax.random.PRNGKey(0)
    C = 32                               # last_channel_n
    out_c = 1 + 2 + 2 + N_ORIENTATIONS   # conf | xy | wh | angle = 11

    k_x, k_w, k_b = jax.random.split(key, 3)
    # Each 1x1 conv weight (oc, C, 1, 1) collapses to (oc, C); the four heads are
    # concatenated into one fused (OUT_C, C) weight + (OUT_C,) bias.
    w_cat = 0.1 * jax.random.normal(k_w, (out_c, C), dtype=jnp.float32)
    b_cat = 0.05 * jax.random.normal(k_b, (out_c,), dtype=jnp.float32)

    # (shape, spatial tile cap, dtype): exercises multi-tile, tiny full-map (masked
    # store), ragged-tail bf16 streaming, and the B==1 two-step (v7x megacore) paths.
    configs = [
        ((2, C, 16, 16), 8192, jnp.float32),    # HW=256 -> grid (2, 1), 256-lane tile
        ((2, C, 8, 8), 8192, jnp.float32),      # HW=64  -> tiny full-extent tile
        ((2, C, 12, 12), 128, jnp.bfloat16),    # HW=144 -> grid (2, 2), ragged tail, bf16 I/O
        ((1, C, 16, 16), 8192, jnp.float32),    # B=1    -> forced 2 spatial steps
    ]
    for i, (shape, tile, dtype) in enumerate(configs):
        x = jax.random.normal(jax.random.fold_in(k_x, i), shape, dtype=jnp.float32).astype(dtype)
        out = jax.block_until_ready(grasp_model_forward(x, w_cat, b_cat, tile_hw=tile))
        ref = _reference_forward(x, w_cat, b_cat)
        assert out.shape == ref.shape == (shape[0], out_c, shape[2], shape[3])
        assert out.dtype == dtype
        out32 = out.astype(jnp.float32)
        if dtype == jnp.float32:
            # conf channel is pure linear: tight check.
            assert jnp.allclose(out32[:, 0:1], ref[:, 0:1], atol=1e-4, rtol=1e-4), (shape, tile)
            assert jnp.allclose(out32, ref, atol=2e-3, rtol=2e-3), (shape, tile)
        else:
            # bf16 streamed inputs/weights/outputs: rounding-limited tolerance.
            assert jnp.allclose(out32, ref, atol=5e-2, rtol=5e-2), (shape, tile)

    print("KERNEL_OK")
</pallas_src>

<mosaic_0001>
module attributes {stable_mosaic.version = 11 : i64} {
  func.func @_grasp_head_kernel(%arg0: i32, %arg1: i32, %arg2: memref<1x32x256xf32, #tpu.memory_space<vmem>>, %arg3: memref<11x32xf32, #tpu.memory_space<vmem>>, %arg4: memref<11x1xf32, #tpu.memory_space<vmem>>, %arg5: memref<1x11x256xf32, #tpu.memory_space<vmem>>) attributes {dimension_semantics = [#tpu.dimension_semantics<parallel>, #tpu.dimension_semantics<parallel>], iteration_bounds = array<i64: 2, 1>, scalar_prefetch = 0 : i64, scratch_operands = 0 : i64, tpu.core_type = #tpu.core_type<tc>, window_params = [{transform_indices = @transform_0, window_bounds = array<i64: 1, 32, 256>}, {pipeline_mode = #tpu.pipeline_mode<synchronous>, transform_indices = @transform_1, window_bounds = array<i64: 11, 32>}, {pipeline_mode = #tpu.pipeline_mode<synchronous>, transform_indices = @transform_2, window_bounds = array<i64: 11, 1>}, {transform_indices = @transform_3, window_bounds = array<i64: 1, 11, 256>}]} {
    %c0 = arith.constant 0 : index
    %c0_0 = arith.constant 0 : index
    %0 = vector.load %arg3[%c0, %c0_0] : memref<11x32xf32, #tpu.memory_space<vmem>>, vector<11x32xf32>
    %c0_1 = arith.constant 0 : index
    %c0_2 = arith.constant 0 : index
    %c0_3 = arith.constant 0 : index
    %1 = vector.load %arg2[%c0_1, %c0_2, %c0_3] : memref<1x32x256xf32, #tpu.memory_space<vmem>>, vector<1x32x256xf32>
    %2 = vector.shape_cast %1 : vector<1x32x256xf32> to vector<32x256xf32>
    %cst = arith.constant dense<0.000000e+00> : vector<11x256xf32>
    %3 = tpu.matmul %0, %2, %cst {dimension_numbers = #tpu.dot_dimension_numbers<[1], [0], [0], [1], [0, 0, 1, 1], [], []>} : vector<11x32xf32>, vector<32x256xf32>, vector<11x256xf32> -> vector<11x256xf32>
    %c0_4 = arith.constant 0 : index
    %c0_5 = arith.constant 0 : index
    %4 = vector.load %arg4[%c0_4, %c0_5] : memref<11x1xf32, #tpu.memory_space<vmem>>, vector<11x1xf32>
    %5 = vector.broadcast %4 : vector<11x1xf32> to vector<11x256xf32>
    %6 = arith.addf %3, %5 : vector<11x256xf32>
    %7 = tpu.iota {dimensions = array<i32: 0>} : vector<11x256xi32>
    %c1_i32 = arith.constant 1 : i32
    %8 = vector.broadcast %c1_i32 : i32 to vector<11x256xi32>
    %9 = arith.cmpi slt, %7, %8 : vector<11x256xi32>
    %c3_i32 = arith.constant 3 : i32
    %10 = vector.broadcast %c3_i32 : i32 to vector<11x256xi32>
    %11 = arith.cmpi sge, %7, %10 : vector<11x256xi32>
    %c5_i32 = arith.constant 5 : i32
    %12 = vector.broadcast %c5_i32 : i32 to vector<11x256xi32>
    %13 = arith.cmpi slt, %7, %12 : vector<11x256xi32>
    %14 = arith.andi %11, %13 : vector<11x256xi1>
    %cst_6 = arith.constant 0.000000e+00 : f32
    %15 = vector.broadcast %cst_6 : f32 to vector<11x256xf32>
    %16 = arith.subf %15, %6 : vector<11x256xf32>
    %17 = arith.select %14, %6, %16 : vector<11x256xi1>, vector<11x256xf32>
    %cst_7 = arith.constant 0.000000e+00 : f32
    %18 = vector.broadcast %cst_7 : f32 to vector<11x256xf32>
    %19 = arith.select %9, %18, %17 : vector<11x256xi1>, vector<11x256xf32>
    %20 = math.exp %19 : vector<11x256xf32>
    %cst_8 = arith.constant 1.000000e+00 : f32
    %21 = vector.broadcast %cst_8 : f32 to vector<11x256xf32>
    %22 = arith.addf %21, %20 : vector<11x256xf32>
    %23 = tpu.reciprocal %22 : vector<11x256xf32> -> vector<11x256xf32>
    %24 = arith.select %14, %20, %23 : vector<11x256xi1>, vector<11x256xf32>
    %25 = arith.select %9, %6, %24 : vector<11x256xi1>, vector<11x256xf32>
    %c0_9 = arith.constant 0 : index
    %c0_10 = arith.constant 0 : index
    %c0_11 = arith.constant 0 : index
    %26 = vector.load %arg5[%c0_9, %c0_10, %c0_11] : memref<1x11x256xf32, #tpu.memory_space<vmem>>, vector<1x11x256xf32>
    %27 = vector.shape_cast %26 : vector<1x11x256xf32> to vector<11x256xf32>
    %28 = vector.shape_cast %25 : vector<11x256xf32> to vector<1x11x256xf32>
    tpu.vector_store %arg5[%c0_9, %c0_10, %c0_11], %28 {strides = array<i32>} : memref<1x11x256xf32, #tpu.memory_space<vmem>>, vector<1x11x256xf32>,
    return
  }
  func.func @transform_0(%arg0: i32, %arg1: i32) -> (i32, i32, i32) {
    %c0_i32 = arith.constant 0 : i32
    %c0_i32_0 = arith.constant 0 : i32
    return %arg0, %c0_i32, %arg1 : i32, i32, i32
  }
  func.func @transform_1(%arg0: i32, %arg1: i32) -> (i32, i32) {
    %c0_i32 = arith.constant 0 : i32
    %c0_i32_0 = arith.constant 0 : i32
    %c0_i32_1 = arith.constant 0 : i32
    return %c0_i32, %c0_i32_0 : i32, i32
  }
  func.func @transform_2(%arg0: i32, %arg1: i32) -> (i32, i32) {
    %c0_i32 = arith.constant 0 : i32
    %c0_i32_0 = arith.constant 0 : i32
    %c0_i32_1 = arith.constant 0 : i32
    return %c0_i32, %c0_i32_0 : i32, i32
  }
  func.func @transform_3(%arg0: i32, %arg1: i32) -> (i32, i32, i32) {
    %c0_i32 = arith.constant 0 : i32
    %c0_i32_0 = arith.constant 0 : i32
    return %arg0, %c0_i32, %arg1 : i32, i32, i32
  }
}

</mosaic_0001>

<llo_original>
// kernel: tpu_custom_call.1
$region0: #{tpu_custom_call.1}
  #allocation0 [shape = 'u32[]', space=smem, size = 0x4, offset = 0x4, fixed_abs, tag = 'smem constant byte address 0x4 - core index']
  #allocation1 [shape = 'u32[144,128]{1,0:T(1,128)}', space=vmem, size = 0x12000, scoped, tag = 'internal scratch']
  %s0 = inlined_call_operand.hbm [shape: f32[2,32,256], index: 0, kind: input, shape index: {}]
  %s1 = inlined_call_operand.vmem [shape: f32[11,32], index: 1, kind: input, shape index: {}]
  %s2 = inlined_call_operand.vmem [shape: f32[11,1], index: 2, kind: input, shape index: {}]
  %s3 = inlined_call_operand.vmem [shape: f32[2,11,256], index: 3, kind: output, shape index: {}]
  %s4 = sld [smem:[#allocation0]]
  $region49: #{tpu_custom_call.1} parent=0
    _
  %s6 = ssub.s32 1, %s4
  %s7 = scalar_select 0, %s6, %s4
  $region1: #{tpu_custom_call.1} parent=0
    #allocation2 [shape = 'u8[65536]{0}', space=vmem, size = 0x10000, scoped, tag = 'input window, operand 0']
    #allocation3 [shape = 's32[2]{0}', space=sflag, size = 0x8, scoped, tag = 'scoped memory for tpu_custom_call.1']
    %8 = vsyncpa [#allocation3], 0
    %s9 = scalar_lea.sflag [#allocation3], 1
    %10 = vsyncpa %s9, 0
    loop: start=0, step=1, limit=4
    $region2: #{tpu_custom_call.1} parent=1 // loop_pre_header
      _
    $region3: #{tpu_custom_call.1} parent=1 // loop_header
      %s12 = sphi 0, %s16
      %p13 = scmp.ge.s32.totalorder %s12, 4
      %s19 = sphi 0, %s31
      %s20 = sphi 0, %s27
      %s21 = sphi 0, %s19
      %s22 = sphi 0, %s20
      %s23 = sphi 0, %s21
      %s24 = sphi 0, %s22
      %s36 = sphi 0, %s38
      %s39 = sphi 0, %s36
      %s40 = sphi 0, %s39
      %s56 = sphi 0, %s40
      %s60 = sphi 0, %s60
      %s62 = sphi 0, %s60
      %s63 = sphi 0, %s62
      %s77 = sphi 0, %s63
      %s81 = sphi 0, %s81
      %s83 = sphi 0, %s81
      %s84 = sphi 0, %s83
      %s98 = sphi 0, %s84
      %s106 = sphi 0, %s108
      %s109 = sphi 0, %s106
      %s110 = sphi 0, %s109
      %s126 = sphi 0, %s110
    $region4: #{tpu_custom_call.1} parent=1 // loop_header_branch
      %15 = sbr.rel (%p13) target = $region8
    $region5: #{tpu_custom_call.1} parent=1 // loop_body
      %s17 = ssub.s32 %s12, 1
      %s18 = ssub.s32 %s12, 2
      %s25 = sadd.s32 1, %s20
      %p26 = scmp.ge.s32.totalorder %s25, 1
      %s27 = scalar_select %p26, 0, %s25
      %s28 = sadd.s32 1, %s19
      %s29 = scalar_select %p26, %s28, %s19
      %p30 = scmp.ge.s32.totalorder %s29, 2
      %s31 = scalar_select %p30, 0, %s29
      %s32 = ssub.s32 %s19, %s31
      %s33 = ssub.s32 %s20, %s27
      %s34 = sor.u32 %s32, %s33
      %p35 = scmp.eq.s32.totalorder %s34, 0
      %s37 = sadd.s32 %s36, 1
      %s38 = scalar_select %p35, %s36, %s37
      %p41 = pneg %p35
      %p42 = scmp.eq.s32.totalorder %s12, 1
      %p43 = por %p41, %p42
      %p44 = scmp.ne.s32.totalorder %s36, %s39
      %p45 = scmp.eq.s32.totalorder %s12, 0
      %p46 = por %p44, %p45
      %p47 = scmp.ne.s32.totalorder %s36, %s39
      %p48 = scmp.eq.s32.totalorder %s17, 1
      %p49 = por %p47, %p48
      %p50 = scmp.ne.s32.totalorder %s39, %s40
      %p51 = scmp.eq.s32.totalorder %s17, 0
      %p52 = por %p50, %p51
      %p53 = scmp.ne.s32.totalorder %s39, %s40
      %p54 = scmp.eq.s32.totalorder %s18, 1
      %p55 = por %p53, %p54
      %p57 = scmp.ne.s32.totalorder %s40, %s56
      %p58 = scmp.eq.s32.totalorder %s18, 0
      %p59 = por %p57, %p58
      %s61 = sadd.s32 %s60, 1
      %p64 = scmp.eq.s32.totalorder %s12, 1
      %p65 = scmp.ne.s32.totalorder %s60, %s62
      %p66 = scmp.eq.s32.totalorder %s12, 0
      %p67 = por %p65, %p66
      %p68 = scmp.ne.s32.totalorder %s60, %s62
      %p69 = scmp.eq.s32.totalorder %s17, 1
      %p70 = por %p68, %p69
      %p71 = scmp.ne.s32.totalorder %s62, %s63
      %p72 = scmp.eq.s32.totalorder %s17, 0
      %p73 = por %p71, %p72
      %p74 = scmp.ne.s32.totalorder %s62, %s63
      %p75 = scmp.eq.s32.totalorder %s18, 1
      %p76 = por %p74, %p75
      %p78 = scmp.ne.s32.totalorder %s63, %s77
      %p79 = scmp.eq.s32.totalorder %s18, 0
      %p80 = por %p78, %p79
      %s82 = sadd.s32 %s81, 1
      %p85 = scmp.eq.s32.totalorder %s12, 1
      %p86 = scmp.ne.s32.totalorder %s81, %s83
      %p87 = scmp.eq.s32.totalorder %s12, 0
      %p88 = por %p86, %p87
      %p89 = scmp.ne.s32.totalorder %s81, %s83
      %p90 = scmp.eq.s32.totalorder %s17, 1
      %p91 = por %p89, %p90
      %p92 = scmp.ne.s32.totalorder %s83, %s84
      %p93 = scmp.eq.s32.totalorder %s17, 0
      %p94 = por %p92, %p93
      %p95 = scmp.ne.s32.totalorder %s83, %s84
      %p96 = scmp.eq.s32.totalorder %s18, 1
      %p97 = por %p95, %p96
      %p99 = scmp.ne.s32.totalorder %s84, %s98
      %p100 = scmp.eq.s32.totalorder %s18, 0
      %p101 = por %p99, %p100
      %s102 = ssub.s32 %s19, %s31
      %s103 = ssub.s32 %s20, %s27
      %s104 = sor.u32 %s102, %s103
      %p105 = scmp.eq.s32.totalorder %s104, 0
      %s107 = sadd.s32 %s106, 1
      %s108 = scalar_select %p105, %s106, %s107
      %p111 = pneg %p105
      %p112 = scmp.eq.s32.totalorder %s12, 1
      %p113 = por %p111, %p112
      %p114 = scmp.ne.s32.totalorder %s106, %s109
      %p115 = scmp.eq.s32.totalorder %s12, 0
      %p116 = por %p114, %p115
      %p117 = scmp.ne.s32.totalorder %s106, %s109
      %p118 = scmp.eq.s32.totalorder %s17, 1
      %p119 = por %p117, %p118
      %p120 = scmp.ne.s32.totalorder %s109, %s110
      %p121 = scmp.eq.s32.totalorder %s17, 0
      %p122 = por %p120, %p121
      %p123 = scmp.ne.s32.totalorder %s109, %s110
      %p124 = scmp.eq.s32.totalorder %s18, 1
      %p125 = por %p123, %p124
      %p127 = scmp.ne.s32.totalorder %s110, %s126
      %p128 = scmp.eq.s32.totalorder %s18, 0
      %p129 = por %p127, %p128
      %p130 = scmp.le.s32.totalorder 1, %s12
      %p131 = scmp.lt.s32.totalorder %s12, 3
      %p132 = pnand %p130, %p131
      %p133 = pneg %p132
      // Predicated region
      $region9: #{tpu_custom_call.1} parent=5 // pred_check
        _
      $region10: #{tpu_custom_call.1} parent=5 // pred_check_branch
        %135 = sbr.rel (%p132) target = $region12
      $region11: #{tpu_custom_call.1} parent=5 // pred_region
        %s136 = ssub.s32 %s12, 1
        // Predicated region
        $region13: #{tpu_custom_call.1} parent=11 // pred_check
          %p137 = pneg %p73
        $region14: #{tpu_custom_call.1} parent=11 // pred_check_branch
          %139 = sbr.rel (%p137) target = $region16
        $region15: #{tpu_custom_call.1} parent=11 // pred_region
          _
        $region16: #{tpu_custom_call.1} parent=11 // pred_fallthru
          _
        // Predicated region
        $region17: #{tpu_custom_call.1} parent=11 // pred_check
          %p140 = pneg %p94
        $region18: #{tpu_custom_call.1} parent=11 // pred_check_branch
          %142 = sbr.rel (%p140) target = $region20
        $region19: #{tpu_custom_call.1} parent=11 // pred_region
          _
        $region20: #{tpu_custom_call.1} parent=11 // pred_fallthru
          _
      $region12: #{tpu_custom_call.1} parent=5 // pred_fallthru
        _
      %p143 = scmp.lt.s32.totalorder %s12, 2
      // Predicated region
      $region21: #{tpu_custom_call.1} parent=5 // pred_check
        %p144 = pneg %p143
      $region22: #{tpu_custom_call.1} parent=5 // pred_check_branch
        %146 = sbr.rel (%p144) target = $region24
      $region23: #{tpu_custom_call.1} parent=5 // pred_region
        // Predicated region
        $region25: #{tpu_custom_call.1} parent=23 // pred_check
          %p147 = pneg %p46
        $region26: #{tpu_custom_call.1} parent=23 // pred_check_branch
          %149 = sbr.rel (%p147) target = $region28
        $region27: #{tpu_custom_call.1} parent=23 // pred_region
          %s150 = sand.u32 %s36, 1
          %s151 = scalar_lea.sflag [#allocation3], %s150
          %s152 = sand.u32 %s36, 1
          %s153 = smul.addr %s152, 64
          %s154 = scalar_lea.vmem [#allocation2], %s153
          %s155 = smul.u32 2, %s20
          %s157 = ssub.s32 1024, 1024
          %158 = vsyncadd %s151, %s157
          %s159 = smul.addr %s19, 8
          %s160 = sadd.s32 %s155, %s159
          %s161 = smul.addr %s160, 128
          %s162 = scalar_lea.hbm %s0, %s161
          %s163 = sshll.u32 %s154, 4
          %s164 = int_to_ptr.vmem [resolvable:$true] %s163
          %169 = dma.hbm_to_vmem [thread:$0]  %s162, 1024, %s164, %s151, 256, 256, 16
        $region28: #{tpu_custom_call.1} parent=23 // pred_fallthru
          _
      $region24: #{tpu_custom_call.1} parent=5 // pred_fallthru
        _
      %p170 = scmp.le.s32.totalorder 1, %s12
      %p171 = scmp.lt.s32.totalorder %s12, 3
      %p172 = pnand %p170, %p171
      %p173 = pneg %p172
      // Predicated region
      $region29: #{tpu_custom_call.1} parent=5 // pred_check
        _
      $region30: #{tpu_custom_call.1} parent=5 // pred_check_branch
        %175 = sbr.rel (%p172) target = $region32
      $region31: #{tpu_custom_call.1} parent=5 // pred_region
        %s176 = ssub.s32 %s12, 1
        %s177 = sand.u32 %s39, 1
        %s178 = scalar_lea.sflag [#allocation3], %s177
        %s179 = sand.u32 %s39, 1
        %s180 = smul.addr %s179, 64
        %s181 = scalar_lea.vmem [#allocation2], %s180
        // Predicated region
        $region33: #{tpu_custom_call.1} parent=31 // pred_check
          %p182 = pneg %p52
        $region34: #{tpu_custom_call.1} parent=31 // pred_check_branch
          %184 = sbr.rel (%p182) target = $region36
        $region35: #{tpu_custom_call.1} parent=31 // pred_region
          %185 = dma.done %s178, 1024
        $region36: #{tpu_custom_call.1} parent=31 // pred_fallthru
          _
        %s186 = sand.u32 %s39, 1
        %s187 = scalar_lea.sflag [#allocation3], %s186
        %s188 = sand.u32 %s39, 1
        %s189 = smul.addr %s188, 64
        %s190 = scalar_lea.vmem [#allocation2], %s189
        %p191 = pneg %p52
        %p192 = pneg %p49
        %p193 = pneg %p73
        %p194 = pneg %p70
        %p195 = pneg %p94
        %p196 = pneg %p91
        %p197 = pneg %p122
        %p198 = pneg %p119
        %s199 = smul.u32 2, %s22
        %p200 = scmp.lt.s32.totalorder %s21, 1
        %s201 = scalar_select %p200, %s21, 1
        %p202 = scmp.lt.s32.totalorder %s199, 1
        %s203 = scalar_select %p202, %s199, 1
        %s204 = smul.addr %s201, 4
        %s205 = sadd.s32 %s203, %s204
        %s206 = smul.addr %s205, 8
        %s207 = scalar_lea.vmem %s3, %s206
        %s208 = smul.u32 2, %s22
        %s209 = smul.u32 2, %s22
        %p210 = scmp.lt.s32.totalorder %s21, 1
        %s211 = scalar_select %p210, %s21, 1
        %p212 = scmp.lt.s32.totalorder %s209, 1
        %s213 = scalar_select %p212, %s209, 1
        %s214 = smul.addr %s211, 4
        %s215 = sadd.s32 %s213, %s214
        %s216 = smul.addr %s215, 8
        %s217 = scalar_lea.vmem %s3, %s216
        %s218 = smul.u32 2, %s22
        %v219 = vld [vmem:[%s1] sm:$0xff]
        %v220 = vld [vmem:[%s1 + $0x8] sm:$0x7]
        %v221 = vld [vmem:[%s181] sm:$0xff]
        %v222 = vld [vmem:[%s181 + $0x8] sm:$0xff]
        %v223 = vld [vmem:[%s181 + $0x10] sm:$0xff]
        %v224 = vld [vmem:[%s181 + $0x18] sm:$0xff]
        %v225 = vld [vmem:[%s181 + $0x20] sm:$0xff]
        %v226 = vld [vmem:[%s181 + $0x28] sm:$0xff]
        %v227 = vld [vmem:[%s181 + $0x30] sm:$0xff]
        %v228 = vld [vmem:[%s181 + $0x38] sm:$0xff]
        %v229 = vld [vmem:[%s2] sm:$0xff]
        %v230 = vld [vmem:[%s2 + $0x8] sm:$0x7]
        %232 = vset.pattern.permute.xlu0 0
        %233 = vperm.xlu0 %232, %v229
        %v234 = vpop.permute.xlu0 %233
        %237 = vset.pattern.permute.xlu0 0
        %238 = vperm.xlu0 %237, %v230
        %v239 = vpop.permute.xlu0 %238
        %vm241 = vcmask 261120
        %v243 = vsel %vm241, %v219, 0
        %v246 = vsel %vm241, %v220, 0
        %248 = vmatprep.subr.mxu0 0.0
        %249 = vmatpush1.msra.mxu0 0.0
        %250 = vmatprep.subr.mxu0 0.0
        %251 = vmatpush1.msra.mxu0 0.0
        %252 = vmatprep.subr.mxu0 0.0
        %253 = vmatpush1.msra.mxu0 0.0
        %254 = vmatprep.subr.mxu0 0.0
        %255 = vmatpush1.msra.mxu0 0.0
        %256 = vmatprep.subr.mxu0 0.0
        %257 = vmatpush1.msra.mxu0 0.0
        %258 = vmatprep.subr.mxu0 0.0
        %259 = vmatpush1.msra.mxu0 0.0
        %260 = vmatprep.subr.mxu0 0.0
        %261 = vmatpush1.msra.mxu0 0.0
        %262 = vmatprep.subr.mxu0 0.0
        %263 = vmatpush1.msra.mxu0 0.0
        %264 = vmatprep.subr.mxu0 0.0
        %265 = vmatpush1.msra.mxu0 0.0
        %266 = vmatprep.subr.mxu0 0.0
        %267 = vmatpush1.msra.mxu0 0.0
        %268 = vmatprep.subr.mxu0 0.0
        %269 = vmatpush1.msra.mxu0 0.0
        %270 = vmatprep.subr.mxu0 0.0
        %271 = vmatpush1.msra.mxu0 0.0
        %272 = vmatprep.subr.mxu0 %v228
        %273 = vmatpush1.msra.mxu0 %v227
        %274 = vmatprep.subr.mxu0 %v226
        %275 = vmatpush1.msra.mxu0 %v225
        %276 = vmatprep.subr.mxu0 %v224
        %277 = vmatpush1.msra.mxu0 %v223
        %278 = vmatprep.subr.mxu0 %v222
        %279 = vmatpush1.msra.mxu0 %v221
        %280 = vmatprep.subr.mxu0 0.0
        %281 = vmatpush2.msra.mxu0 0.0
        %282 = vmatprep.subr.mxu0 0.0
        %283 = vmatpush2.msra.mxu0 0.0
        %284 = vmatprep.subr.mxu0 0.0
        %285 = vmatpush2.msra.mxu0 0.0
        %286 = vmatprep.subr.mxu0 0.0
        %287 = vmatpush2.msra.mxu0 0.0
        %288 = vmatprep.subr.mxu0 0.0
        %289 = vmatpush2.msra.mxu0 0.0
        %290 = vmatprep.subr.mxu0 0.0
        %291 = vmatpush2.msra.mxu0 0.0
        %292 = vmatprep.subr.mxu0 0.0
        %293 = vmatpush2.msra.mxu0 0.0
        %294 = vmatprep.subr.mxu0 0.0
        %295 = vmatpush2.msra.mxu0 0.0
        %296 = vmatprep.subr.mxu0 0.0
        %297 = vmatpush2.msra.mxu0 0.0
        %298 = vmatprep.subr.mxu0 0.0
        %299 = vmatpush2.msra.mxu0 0.0
        %300 = vmatprep.subr.mxu0 0.0
        %301 = vmatpush2.msra.mxu0 0.0
        %302 = vmatprep.subr.mxu0 0.0
        %303 = vmatpush2.msra.mxu0 0.0
        %304 = vmatprep.subr.mxu0 0.0
        %305 = vmatpush2.msra.mxu0 0.0
        %306 = vmatprep.subr.mxu0 0.0
        %307 = vmatpush2.msra.mxu0 0.0
        %308 = vmatprep.subr.mxu0 0.0
        %309 = vmatpush2.msra.mxu0 0.0
        %310 = vmatprep.subr.mxu0 0.0
        %311 = vmatpush2.msra.mxu0 0.0
        %312 = vmatprep.mubr.f32.mxu0 0.0
        %313 = vmatmul.mubr.f32.gmra.mxu0 %v243
        %v314 = vpop.f32.mrf.mxu0
        %v315 = vadd.f32 %v234, %v314
        %v316 = vpop.f32.mrf.mxu0
        %v317 = vadd.f32 %v234, %v316
        %318 = vmatprep.mubr.f32.mxu0 0.0
        %319 = vmatmul.mubr.f32.gmra.mxu0 %v246
        %v320 = vpop.f32.mrf.mxu0
        %v321 = vadd.f32 %v239, %v320
        %v322 = vpop.f32.mrf.mxu0
        %v323 = vadd.f32 %v239, %v322
        %324 = vdwg.mxu0
        %v325 = vlaneseq
        %v326 = vshrl.u32 %v325, 7
        %v327 = vadd.s32 %v326, 8
        %vm328 = vcmp.lt.s32.totalorder %v326, 1
        %vm329 = vcmp.lt.s32.totalorder %v327, 1
        %vm330 = vcmp.ge.s32.totalorder %v326, 3
        %vm331 = vcmp.ge.s32.totalorder %v327, 3
        %vm332 = vcmp.lt.s32.totalorder %v326, 5
        %vm333 = vcmp.lt.s32.totalorder %v327, 5
        %vm334 = vmand %vm330, %vm332
        %vm335 = vmand %vm331, %vm333
        %v336 = vsub.f32 0.0, %v315
        %v337 = vsub.f32 0.0, %v317
        %v338 = vsub.f32 0.0, %v321
        %v339 = vsub.f32 0.0, %v323
        %v340 = vsel %vm334, %v315, %v336
        %v341 = vsel %vm334, %v317, %v337
        %v342 = vsel %vm335, %v321, %v338
        %v343 = vsel %vm335, %v323, %v339
        %v344 = vsel %vm328, 0.0, %v340
        %v345 = vsel %vm328, 0.0, %v341
        %v346 = vsel %vm329, 0.0, %v342
        %v347 = vsel %vm329, 0.0, %v343
        %v348 = vmul.f32 %v344, 1.442695
        %v349 = vpow.pop %v348
        %v350 = vmul.f32 %v345, 1.442695
        %v351 = vpow.pop %v350
        %v352 = vmul.f32 %v346, 1.442695
        %v353 = vpow.pop %v352
        %v354 = vmul.f32 %v347, 1.442695
        %v355 = vpow.pop %v354
        %v356 = vadd.f32 %v349, 1.0
        %v357 = vadd.f32 %v351, 1.0
        %v358 = vadd.f32 %v353, 1.0
        %v359 = vadd.f32 %v355, 1.0
        %v360 = vrcp.pop %v356
        %v361 = vrcp.pop %v357
        %v362 = vrcp.pop %v358
        %v363 = vrcp.pop %v359
        %v364 = vsel %vm334, %v349, %v360
        %v365 = vsel %vm334, %v351, %v361
        %v366 = vsel %vm335, %v353, %v362
        %v367 = vsel %vm335, %v355, %v363
        %v368 = vsel %vm328, %v315, %v364
        %v369 = vsel %vm328, %v317, %v365
        %v370 = vsel %vm329, %v321, %v366
        %v371 = vsel %vm329, %v323, %v367
        %372 = vst [vmem:[%s217] sm:$0xff] %v368
        %373 = vst [vmem:[%s217 + $0x8] sm:$0xff] %v369
        %374 = vst [vmem:[%s217 + $0x10] sm:$0x7] %v370
        %375 = vst [vmem:[%s217 + $0x18] sm:$0x7] %v371
        %s376 = smul.u32 2, %s22
        %p377 = scmp.lt.s32.totalorder %s21, 1
        %s378 = scalar_select %p377, %s21, 1
        %p379 = scmp.lt.s32.totalorder %s376, 1
        %s380 = scalar_select %p379, %s376, 1
        %s381 = smul.addr %s378, 4
        %s382 = sadd.s32 %s380, %s381
        %s383 = smul.addr %s382, 8
        %s384 = scalar_lea.vmem %s3, %s383
        // Predicated region
        $region37: #{tpu_custom_call.1} parent=31 // pred_check
          %p385 = pneg %p119
        $region38: #{tpu_custom_call.1} parent=31 // pred_check_branch
          %387 = sbr.rel (%p385) target = $region40
        $region39: #{tpu_custom_call.1} parent=31 // pred_region
          %s388 = smul.u32 2, %s22
        $region40: #{tpu_custom_call.1} parent=31 // pred_fallthru
          _
      $region32: #{tpu_custom_call.1} parent=5 // pred_fallthru
        _
      %p389 = scmp.le.s32.totalorder 2, %s12
      // Predicated region
      $region41: #{tpu_custom_call.1} parent=5 // pred_check
        %p390 = pneg %p389
      $region42: #{tpu_custom_call.1} parent=5 // pred_check_branch
        %392 = sbr.rel (%p390) target = $region44
      $region43: #{tpu_custom_call.1} parent=5 // pred_region
        %s393 = ssub.s32 %s12, 2
        // Predicated region
        $region45: #{tpu_custom_call.1} parent=43 // pred_check
          %p394 = pneg %p125
        $region46: #{tpu_custom_call.1} parent=43 // pred_check_branch
          %396 = sbr.rel (%p394) target = $region48
        $region47: #{tpu_custom_call.1} parent=43 // pred_region
          %s397 = smul.u32 2, %s24
          %p398 = scmp.lt.s32.totalorder %s23, 1
          %s399 = scalar_select %p398, %s23, 1
          %p400 = scmp.lt.s32.totalorder %s397, 1
          %s401 = scalar_select %p400, %s397, 1
          %s402 = smul.addr %s399, 4
          %s403 = sadd.s32 %s401, %s402
          %s404 = smul.addr %s403, 8
          %s405 = scalar_lea.vmem %s3, %s404
        $region48: #{tpu_custom_call.1} parent=43 // pred_fallthru
          _
      $region44: #{tpu_custom_call.1} parent=5 // pred_fallthru
        _
    $region6: #{tpu_custom_call.1} parent=1 // loop_footer
      %s16 = sadd.s32 1, %s12
    $region7: #{tpu_custom_call.1} parent=1 // loop_footer_branch
      %11 = sbr.rel target = $region3
    $region8: #{tpu_custom_call.1} parent=1 // loop_exit
      _
    %406 = vsyncpa [#allocation3], 1
    %s407 = scalar_lea.sflag [#allocation3], 1
    %408 = vsyncpa %s407, 1

</llo_original>
